<compile_context>
chip_gen: v6e
topology: v6e:2x2x1
jax: 0.10.0
libtpu: 0.0.40
codegen_flags: <defaults>
</compile_context>

<pallas_src>
import functools

import jax
import jax.numpy as jnp
from jax.experimental import pallas as pl
from jax.experimental.pallas import tpu as pltpu


def _round_up(v, m):
    return (v + m - 1) // m * m


def _num_tensorcores():
    """Best-effort TensorCore-per-chip count (v7x=2, v5e/v6e=1)."""
    try:
        info = pltpu.get_tpu_info()
        for attr in ("num_cores", "core_count", "num_tensorcores",
                     "tensorcores_per_chip"):
            v = getattr(info, attr, None)
            if isinstance(v, int) and v > 0:
                return v
    except Exception:
        pass
    try:
        v = getattr(jax.devices()[0], "num_cores", None)
        if isinstance(v, int) and v > 0:
            return v
    except Exception:
        pass
    return 1


def _pick_batch_block(n, lanes_in, lanes_out, itemsize, num_cores):
    """Images per grid step, sized from a per-block VMEM budget.

    Returns bn such that bn == n (one full block) or bn % 8 == 0, because
    with the 2-D (N, C*Ho*Wo) layout the batch dim is the sublane dim of
    the block and must be a multiple of 8 unless it spans the full array.
    """
    per_image = (_round_up(lanes_in, 128) + _round_up(lanes_out, 128)) * itemsize
    budget = 8 * 1024 * 1024          # per block; ~2x with double buffering
    bn = max(1, min(n, budget // max(1, per_image)))
    if num_cores >= 2 and n >= 2:
        # Keep at least `num_cores` grid steps so a multi-TC chip (v7x) can
        # shard the "parallel" axis.  Single-TC chips skip this (pure
        # per-step overhead there).
        bn = min(bn, pl.cdiv(n, num_cores))
    bn = min(bn, n)
    if bn != n:
        bn = max((bn // 8) * 8, 8)    # sublane legality: multiple of 8
        bn = min(bn, n)               # may collapse back to a single block
    return bn


def _shortcut_kernel(x_ref, o_ref, *, lo, hi):
    # x_ref: (bn, C_in  * Ho * Wo)  -- already stride-2 subsampled, flattened
    # o_ref: (bn, C_out * Ho * Wo)  -- channel-padded output, flattened
    bn, l_out = o_ref.shape
    dt = o_ref.dtype

    # Zero the two padded channel slabs (disjoint from the data slab, so each
    # output element is written exactly once).
    if lo > 0:
        o_ref[:, :lo] = jnp.zeros((bn, lo), dt)
    if hi < l_out:
        o_ref[:, hi:] = jnp.zeros((bn, l_out - hi), dt)

    # One dense, lane-aligned slab copy for the real data.
    o_ref[:, lo:hi] = x_ref[...]


def lambda_layer_shortcut(x_nchw, planes, *, max_batch_block=None):
    """JAX/Pallas equivalent of the ResNet option-A LambdaLayer shortcut.

    Equivalent to: F.pad(x[:, :, ::2, ::2],
                         (0, 0, 0, 0, planes//4, planes//4), "constant", 0)
    Input/output follow PyTorch NCHW conventions.
    """
    n, c, h, w = x_nchw.shape
    pad = planes // 4
    c_out = c + 2 * pad
    ho, wo = (h + 1) // 2, (w + 1) // 2
    L = ho * wo

    # Both stride-2 subsamples as one fused XLA slice (a lane-direction
    # stride cannot be expressed as an (8,128)-legal BlockSpec), then a free
    # reshape so the kernel sees a lane-dense (N, C*Ho*Wo) slab.
    x_sub = x_nchw[:, :, ::2, ::2]                      # (N, C, Ho, Wo)
    x_flat = x_sub.reshape(n, c * L)

    lanes_in, lanes_out = c * L, c_out * L
    bn = _pick_batch_block(n, lanes_in, lanes_out,
                           jnp.dtype(x_nchw.dtype).itemsize,
                           _num_tensorcores())
    if max_batch_block is not None:
        bn = max(1, min(bn, max_batch_block))
        if bn != n and bn % 8 != 0:
            bn = min(n, max((bn // 8) * 8, 8))
    grid = (pl.cdiv(n, bn),)

    kernel = functools.partial(_shortcut_kernel, lo=pad * L, hi=(pad + c) * L)
    out_flat = pl.pallas_call(
        kernel,
        out_shape=jax.ShapeDtypeStruct((n, lanes_out), x_nchw.dtype),
        grid=grid,
        in_specs=[pl.BlockSpec((bn, lanes_in), lambda b: (b, 0))],
        out_specs=pl.BlockSpec((bn, lanes_out), lambda b: (b, 0)),
        compiler_params=pltpu.CompilerParams(
            dimension_semantics=("parallel",),
            vmem_limit_bytes=48 * 1024 * 1024),
    )(x_flat)

    return out_flat.reshape(n, c_out, ho, wo)           # free reshape to NCHW


def _reference(x, planes):
    p = planes // 4
    return jnp.pad(x[:, :, ::2, ::2], ((0, 0), (p, p), (0, 0), (0, 0)))


if __name__ == "__main__":
    # LambdaLayer has no parameters; only input tensors are needed.
    key = jax.random.PRNGKey(0)

    # Small shape consistent with the module's usage.
    x = jax.random.normal(key, (2, 4, 16, 16), dtype=jnp.float32)    # NCHW
    planes = 8                                  # pad = 2 per side -> C: 4 -> 8
    out = jax.block_until_ready(lambda_layer_shortcut(x, planes))
    ref = _reference(x, planes)
    assert out.shape == (2, 8, 8, 8), out.shape
    assert out.dtype == x.dtype
    assert jnp.array_equal(out, ref), "mismatch vs reference (small shape)"

    # A ResNet56-like stage shape (exercises batch blocking / lane-dense copy).
    x2 = jax.random.normal(jax.random.PRNGKey(1), (8, 16, 32, 32),
                           dtype=jnp.float32)
    out2 = jax.block_until_ready(lambda_layer_shortcut(x2, 32))
    ref2 = _reference(x2, 32)
    assert out2.shape == (8, 32, 16, 16), out2.shape
    assert jnp.array_equal(out2, ref2), "mismatch vs reference (stage shape)"

    # Ragged batch: N=10 with a forced 8-image block -> 2 grid steps, the last
    # block only partially valid (exercises Pallas OOB masked-write handling).
    x3 = jax.random.normal(jax.random.PRNGKey(2), (10, 16, 32, 32),
                           dtype=jnp.float32)
    out3 = jax.block_until_ready(
        lambda_layer_shortcut(x3, 32, max_batch_block=8))
    ref3 = _reference(x3, 32)
    assert out3.shape == (10, 32, 16, 16), out3.shape
    assert jnp.array_equal(out3, ref3), "mismatch vs reference (ragged batch)"

    print("KERNEL_OK")
</pallas_src>

<mosaic_0001>
module attributes {stable_mosaic.version = 11 : i64} {
  func.func @_shortcut_kernel(%arg0: i32, %arg1: memref<2x256xf32, #tpu.memory_space<vmem>>, %arg2: memref<2x512xf32, #tpu.memory_space<vmem>>) attributes {dimension_semantics = [#tpu.dimension_semantics<parallel>], iteration_bounds = array<i64: 1>, scalar_prefetch = 0 : i64, scratch_operands = 0 : i64, tpu.core_type = #tpu.core_type<tc>, window_params = [{transform_indices = @transform_0, window_bounds = array<i64: 2, 256>}, {transform_indices = @transform_1, window_bounds = array<i64: 2, 512>}]} {
    %cst = arith.constant 0.000000e+00 : f32
    %0 = vector.broadcast %cst : f32 to vector<2x128xf32>
    %c0 = arith.constant 0 : index
    %c0_0 = arith.constant 0 : index
    %1 = vector.load %arg2[%c0, %c0_0] : memref<2x512xf32, #tpu.memory_space<vmem>>, vector<2x128xf32>
    tpu.vector_store %arg2[%c0, %c0_0], %0 {strides = array<i32>} : memref<2x512xf32, #tpu.memory_space<vmem>>, vector<2x128xf32>,
    %cst_1 = arith.constant 0.000000e+00 : f32
    %2 = vector.broadcast %cst_1 : f32 to vector<2x128xf32>
    %c0_2 = arith.constant 0 : index
    %c384 = arith.constant 384 : index
    %3 = vector.load %arg2[%c0_2, %c384] : memref<2x512xf32, #tpu.memory_space<vmem>>, vector<2x128xf32>
    tpu.vector_store %arg2[%c0_2, %c384], %2 {strides = array<i32>} : memref<2x512xf32, #tpu.memory_space<vmem>>, vector<2x128xf32>,
    %c0_3 = arith.constant 0 : index
    %c0_4 = arith.constant 0 : index
    %4 = vector.load %arg1[%c0_3, %c0_4] : memref<2x256xf32, #tpu.memory_space<vmem>>, vector<2x256xf32>
    %c0_5 = arith.constant 0 : index
    %c128 = arith.constant 128 : index
    %5 = vector.load %arg2[%c0_5, %c128] : memref<2x512xf32, #tpu.memory_space<vmem>>, vector<2x256xf32>
    tpu.vector_store %arg2[%c0_5, %c128], %4 {strides = array<i32>} : memref<2x512xf32, #tpu.memory_space<vmem>>, vector<2x256xf32>,
    return
  }
  func.func @transform_0(%arg0: i32) -> (i32, i32) {
    %c0_i32 = arith.constant 0 : i32
    %c0_i32_0 = arith.constant 0 : i32
    return %arg0, %c0_i32 : i32, i32
  }
  func.func @transform_1(%arg0: i32) -> (i32, i32) {
    %c0_i32 = arith.constant 0 : i32
    %c0_i32_0 = arith.constant 0 : i32
    return %arg0, %c0_i32 : i32, i32
  }
}

</mosaic_0001>

<llo_original>
// kernel: tpu_custom_call.1
$region0: #{tpu_custom_call.1}
  #allocation0 [shape = 'u32[]', space=smem, size = 0x4, offset = 0x4, fixed_abs, tag = 'smem constant byte address 0x4 - core index']
  #allocation1 [shape = 'u32[144,128]{1,0:T(1,128)}', space=vmem, size = 0x12000, scoped, tag = 'internal scratch']
  %s0 = inlined_call_operand.hbm [shape: f32[2,256], index: 0, kind: input, shape index: {}]
  %s1 = inlined_call_operand.hbm [shape: f32[2,512], index: 1, kind: output, shape index: {}]
  %s2 = sld [smem:[#allocation0]]
  $region18: #{tpu_custom_call.1} parent=0
    _
  %s4 = ssub.s32 1, %s2
  %s5 = scalar_select 0, %s4, %s2
  $region1: #{tpu_custom_call.1} parent=0
    #allocation2 [shape = 'u8[2048]{0}', space=vmem, size = 0x800, scoped, tag = 'input window, operand 0, single buffered']
    #allocation3 [shape = 's32[1]{0}', space=sflag, size = 0x4, scoped, tag = 'scoped memory for tpu_custom_call.1']
    #allocation4 [shape = 's32[1]{0}', space=sflag, size = 0x4, scoped, tag = 'scoped memory for tpu_custom_call.1']
    #allocation5 [shape = 'u8[4096]{0}', space=vmem, size = 0x1000, scoped, tag = 'output window, operand 0, single buffered']
    %6 = vsyncpa [#allocation3], 0
    %7 = vsyncpa [#allocation4], 0
    // Predicated region
    $region2: #{tpu_custom_call.1} parent=1 // pred_check
      _
    $region3: #{tpu_custom_call.1} parent=1 // pred_check_branch
      %9 = sbr.rel (0) target = $region5
    $region4: #{tpu_custom_call.1} parent=1 // pred_region
      %s11 = ssub.s32 64, 64
      %12 = vsyncadd [#allocation3], %s11
      %s14 = sshll.u32 [#allocation2], 4
      %s15 = int_to_ptr.vmem [resolvable:$true] %s14
      %17 = dma.hbm_to_vmem [thread:$0]  %s0, 64, %s15, [#allocation3]
    $region5: #{tpu_custom_call.1} parent=1 // pred_fallthru
      _
    // Predicated region
    $region6: #{tpu_custom_call.1} parent=1 // pred_check
      _
    $region7: #{tpu_custom_call.1} parent=1 // pred_check_branch
      %19 = sbr.rel (0) target = $region9
    $region8: #{tpu_custom_call.1} parent=1 // pred_region
      %20 = dma.done [#allocation3], 64
    $region9: #{tpu_custom_call.1} parent=1 // pred_fallthru
      _
    %21 = vst [vmem:[#allocation5] sm:$0x3] 0.0
    %22 = vst [vmem:[#allocation5 + $0x6] sm:$0x3] 0.0
    %v23 = vld [vmem:[#allocation2] sm:$0xf]
    %24 = vst [vmem:[#allocation5 + $0x2] sm:$0xf] %v23
    // Predicated region
    $region10: #{tpu_custom_call.1} parent=1 // pred_check
      _
    $region11: #{tpu_custom_call.1} parent=1 // pred_check_branch
      %26 = sbr.rel (0) target = $region13
    $region12: #{tpu_custom_call.1} parent=1 // pred_region
      %s28 = ssub.s32 128, 128
      %29 = vsyncadd [#allocation4], %s28
      %s31 = sshll.u32 [#allocation5], 4
      %s32 = int_to_ptr.vmem [resolvable:$true] %s31
      %34 = dma.vmem_to_hbm [thread:$0]  %s32, 128, %s1, [#allocation4]
    $region13: #{tpu_custom_call.1} parent=1 // pred_fallthru
      _
    // Predicated region
    $region14: #{tpu_custom_call.1} parent=1 // pred_check
      _
    $region15: #{tpu_custom_call.1} parent=1 // pred_check_branch
      %36 = sbr.rel (0) target = $region17
    $region16: #{tpu_custom_call.1} parent=1 // pred_region
      %37 = dma.done [#allocation4], 128
    $region17: #{tpu_custom_call.1} parent=1 // pred_fallthru
      _
    %38 = vsyncpa [#allocation3], 1
    %39 = vsyncpa [#allocation4], 1

</llo_original>
